<compile_context>
chip_gen: v5e
topology: v5e:2x2
jax: 0.10.0
libtpu: 0.0.40
codegen_flags: <defaults>
</compile_context>

<pallas_src>
import jax
import jax.numpy as jnp
import numpy as np
from jax.experimental import pallas as pl
from jax.experimental.pallas import tpu as pltpu

# ----- model dims (small, consistent with the module's forward) -------------
VOCAB = 50        # voca_size
EMB = 16          # embedding_size
HID = 32          # hidden_size
NUM_CLASSES = 10  # num_classes
MAX_LEN = 8       # max_length
BATCH = 4         # batch

# ----- derived sizes / packed-slab row offsets -------------------------------
TN = BATCH * MAX_LEN          # 32  (flattened "time x gru-batch")
H2 = 2 * HID                  # 64
H3 = 3 * HID                  # 96
H4 = 4 * HID                  # 128

# GRU slab (width = 4H = 128 lanes)
ROW_WIH0 = 0                          # rows [0, E)        : W_ih0^T   (E, 3H)
ROW_WHH0 = EMB                        # rows [E, E+H)      : W_hh0^T   (H, 3H)
ROW_W1CAT = EMB + HID                 # rows [.., +2H)     : fused L1  (2H, 4H)
ROW_B0 = EMB + HID + 2 * HID          # row               : b_ih0 + [b_hh0_rz,0]
ROW_BHH0N = ROW_B0 + 1                # row               : b_hh0 (n gate only)
ROW_B1CAT = ROW_B0 + 2                # row               : fused L1 bias (4H)
GRU_ROWS = ROW_B0 + 3                 # 115
GRU_ROWS_PAD = ((GRU_ROWS + 7) // 8) * 8   # 120

# head slab (width = 128 lanes)
ROW_WINTER = 0                        # rows [0, H)        : W_inter^T (H, C)
ROW_W1BLK = HID                       # rows [H, H+2TN)    : kron(I_B, W_agg1) (2TN, TN) | b_agg1 col
ROW_W2BLK = HID + 2 * TN              # rows [.., +B)      : kron(I_B, W_agg2) (B, 2TN)  | b_agg2 scalar
HEAD_ROWS = ROW_W2BLK + BATCH         # 100
HEAD_ROWS_PAD = ((HEAD_ROWS + 7) // 8) * 8  # 104
HEAD_W = 128


# ----------------------------- Pallas kernel --------------------------------
def exam_kernel(x_ref, gru_ref, head_ref, agreg_ref, prob_ref, class_ref):
    T, N, H, C = BATCH, MAX_LEN, HID, NUM_CLASSES

    # ---- one-time weight loads / slices (off the recurrence critical path) --
    wih0 = gru_ref[ROW_WIH0:ROW_WIH0 + EMB, 0:H3]          # (E, 3H)
    whh0 = gru_ref[ROW_WHH0:ROW_WHH0 + H, 0:H3]            # (H, 3H)
    w1cat = gru_ref[ROW_W1CAT:ROW_W1CAT + H2, :]           # (2H, 4H)
    b0f = gru_ref[ROW_B0:ROW_B0 + 1, 0:H3]                 # (1, 3H)
    bhh0n = gru_ref[ROW_BHH0N:ROW_BHH0N + 1, 0:H]          # (1, H)
    b1cat = gru_ref[ROW_B1CAT:ROW_B1CAT + 1, :]            # (1, 4H)

    # hoisted broadcasts (don't re-broadcast inside the unrolled loop)
    bhh0n_b = jnp.broadcast_to(bhh0n, (N, H))
    b1cat_b = jnp.broadcast_to(b1cat, (N, H4))

    # ---- layer-0 input projection hoisted out of the recurrence -------------
    # gi0_all[t*N:(t+1)*N] = x_t @ W_ih0^T + b_ih0 + [b_hh0_rz, 0]
    gi0_all = jnp.dot(x_ref[...], wih0,
                      preferred_element_type=jnp.float32) + b0f   # (T*N, 3H)

    h0 = jnp.zeros((N, H), jnp.float32)
    h1 = jnp.zeros((N, H), jnp.float32)
    h1_rows = []

    # Static unrolled time loop (T is small and compile-time constant).
    for t in range(T):
        # ------- layer 0: only the hidden matmul sits on the serial path -----
        gi0 = gi0_all[t * N:(t + 1) * N, :]                          # (N, 3H)
        gh0 = jnp.dot(h0, whh0, preferred_element_type=jnp.float32)  # (N, 3H)
        rz0 = jax.nn.sigmoid(gi0[:, :H2] + gh0[:, :H2])   # r,z in one EUP pass
        r0 = rz0[:, :H]
        z0 = rz0[:, H:]
        n0 = jnp.tanh(gi0[:, H2:] + r0 * (gh0[:, H2:] + bhh0n_b))
        h0 = (1.0 - z0) * n0 + z0 * h0

        # ------- layer 1: single fused matmul for gi1 and gh1 ----------------
        # concat([h0, h1]) @ [[Wih1_rz, Wih1_n, 0], [Whh1_rz, 0, Whh1_n]]
        cat = jnp.concatenate([h0, h1], axis=1)                      # (N, 2H)
        o1 = jnp.dot(cat, w1cat,
                     preferred_element_type=jnp.float32) + b1cat_b   # (N, 4H)
        rz1 = jax.nn.sigmoid(o1[:, :H2])
        r1 = rz1[:, :H]
        z1 = rz1[:, H:]
        n1 = jnp.tanh(o1[:, H2:H3] + r1 * o1[:, H3:])
        h1 = (1.0 - z1) * n1 + z1 * h1
        h1_rows.append(h1)

    # ---- head: interaction + aggregations, once, off the recurrence ---------
    h1_slab = jnp.concatenate(h1_rows, axis=0)                       # (T*N, H)

    winter = head_ref[ROW_WINTER:ROW_WINTER + H, 0:C]                # (H, C)
    g_flat = jnp.dot(h1_slab, winter,
                     preferred_element_type=jnp.float32)             # (T*N, C)

    # aggregation1 as one block-diagonal matmul: kron(I_T, W_agg1) @ g + b
    w1full = head_ref[ROW_W1BLK:ROW_W1BLK + 2 * TN, 0:TN + 1]        # (2TN, TN+1)
    w1blk = w1full[:, 0:TN]
    b1col = w1full[:, TN:TN + 1]
    a1 = jnp.dot(w1blk, g_flat, preferred_element_type=jnp.float32) + b1col
    a1 = jnp.maximum(a1, 0.0)
    # dropout(p=0.5) is identity in eval mode (training=False).

    # aggregation2 as one block-diagonal matmul: kron(I_T, W_agg2) @ a1 + b2
    w2full = head_ref[ROW_W2BLK:ROW_W2BLK + T, 0:2 * TN + 1]         # (T, 2TN+1)
    w2blk = w2full[:, 0:2 * TN]
    b2 = w2full[0:1, 2 * TN:2 * TN + 1]                              # (1, 1)
    agreg = jnp.dot(w2blk, a1, preferred_element_type=jnp.float32) + b2
    agreg_ref[...] = agreg                                           # (T, C)

    # ---- softmax + argmax epilogue ------------------------------------------
    m = jnp.max(agreg, axis=1, keepdims=True)
    e = jnp.exp(agreg - m)
    prob = e / jnp.sum(e, axis=1, keepdims=True)
    prob_ref[...] = prob

    # argmax on the logits (softmax is monotonic; same first-max index)
    idx = jax.lax.broadcasted_iota(jnp.int32, (T, C), 1)
    cls = jnp.min(jnp.where(agreg == m, idx, C), axis=1, keepdims=True)
    class_ref[...] = cls.astype(jnp.int32)


# ------------------------- host-side weight packing --------------------------
def _pack_params(params):
    f32 = jnp.float32
    H, E, C, L, B = HID, EMB, NUM_CLASSES, MAX_LEN, BATCH

    wih0_t = params["w_ih0"].T.astype(f32)     # (E, 3H)
    whh0_t = params["w_hh0"].T.astype(f32)     # (H, 3H)
    wih1_t = params["w_ih1"].T.astype(f32)     # (H, 3H)
    whh1_t = params["w_hh1"].T.astype(f32)     # (H, 3H)

    # fused layer-1 weight: concat([h0, h1]) -> [rz (2H) | gi_n (H) | gh_n (H)]
    w1cat = jnp.zeros((2 * H, 4 * H), f32)
    w1cat = w1cat.at[:H, :2 * H].set(wih1_t[:, :2 * H])
    w1cat = w1cat.at[H:, :2 * H].set(whh1_t[:, :2 * H])
    w1cat = w1cat.at[:H, 2 * H:3 * H].set(wih1_t[:, 2 * H:])
    w1cat = w1cat.at[H:, 3 * H:].set(whh1_t[:, 2 * H:])

    # folded biases
    b0_fold = params["b_ih0"] + jnp.concatenate(
        [params["b_hh0"][:2 * H], jnp.zeros((H,), f32)])
    bhh0_n = params["b_hh0"][2 * H:]
    b1cat = jnp.concatenate([
        params["b_ih1"][:2 * H] + params["b_hh1"][:2 * H],
        params["b_ih1"][2 * H:],
        params["b_hh1"][2 * H:]])

    gru = jnp.zeros((GRU_ROWS_PAD, 4 * H), f32)
    gru = gru.at[ROW_WIH0:ROW_WIH0 + E, 0:3 * H].set(wih0_t)
    gru = gru.at[ROW_WHH0:ROW_WHH0 + H, 0:3 * H].set(whh0_t)
    gru = gru.at[ROW_W1CAT:ROW_W1CAT + 2 * H, :].set(w1cat)
    gru = gru.at[ROW_B0, 0:3 * H].set(b0_fold)
    gru = gru.at[ROW_BHH0N, 0:H].set(bhh0_n)
    gru = gru.at[ROW_B1CAT, :].set(b1cat)

    # head slab: interaction + block-diagonal aggregation weights
    head = jnp.zeros((HEAD_ROWS_PAD, HEAD_W), f32)
    head = head.at[ROW_WINTER:ROW_WINTER + H, 0:C].set(params["w_inter"].T)

    w1blk = jnp.kron(jnp.eye(B, dtype=f32), params["w_agg1"])   # (2TN, TN)
    head = head.at[ROW_W1BLK:ROW_W1BLK + 2 * TN, 0:TN].set(w1blk)
    head = head.at[ROW_W1BLK:ROW_W1BLK + 2 * TN, TN].set(
        jnp.tile(params["b_agg1"], B))

    w2blk = jnp.kron(jnp.eye(B, dtype=f32), params["w_agg2"])   # (B, 2TN)
    head = head.at[ROW_W2BLK:ROW_W2BLK + B, 0:2 * TN].set(w2blk)
    head = head.at[ROW_W2BLK, 2 * TN].set(params["b_agg2"][0])
    return gru, head


# ------------------------------- wrapper -------------------------------------
def exam_additional_gru_forward(tokens, params):
    """Forward pass of EXAM_ADDITIONAL_GRU. tokens: (batch, max_length) int32."""
    # Embedding lookup (gather) stays in plain JAX.
    x = jnp.take(params["emb"], tokens, axis=0).astype(jnp.float32)  # (B, L, E)
    B, L, E = x.shape
    C = NUM_CLASSES
    x_flat = x.reshape(B * L, E)

    gru_slab, head_slab = _pack_params(params)

    out_shapes = (
        jax.ShapeDtypeStruct((B, C), jnp.float32),   # agreg
        jax.ShapeDtypeStruct((B, C), jnp.float32),   # prob
        jax.ShapeDtypeStruct((B, 1), jnp.int32),     # class
    )
    vmem = pl.BlockSpec(memory_space=pltpu.MemorySpace.VMEM)

    agreg, prob, cls = pl.pallas_call(
        exam_kernel,
        out_shape=out_shapes,
        in_specs=[vmem, vmem, vmem],
        out_specs=(vmem, vmem, vmem),
    )(x_flat, gru_slab, head_slab)

    return agreg, prob, cls.reshape(B)


# --------------------------- pure-JAX reference -------------------------------
def reference_forward(tokens, p):
    x = jnp.take(p["emb"], tokens, axis=0).astype(jnp.float32)  # (B, L, E)
    B, L, _ = x.shape
    H = HID

    def cell(x_t, h, wih, whh, bih, bhh):
        gi = x_t @ wih.T + bih
        gh = h @ whh.T + bhh
        r = jax.nn.sigmoid(gi[:, :H] + gh[:, :H])
        z = jax.nn.sigmoid(gi[:, H:2 * H] + gh[:, H:2 * H])
        n = jnp.tanh(gi[:, 2 * H:] + r * gh[:, 2 * H:])
        return (1.0 - z) * n + z * h

    h0 = jnp.zeros((L, H), jnp.float32)
    h1 = jnp.zeros((L, H), jnp.float32)
    outs = []
    for t in range(B):
        h0 = cell(x[t], h0, p["w_ih0"], p["w_hh0"], p["b_ih0"], p["b_hh0"])
        h1 = cell(h0, h1, p["w_ih1"], p["w_hh1"], p["b_ih1"], p["b_hh1"])
        outs.append(h1)
    wl = jnp.stack(outs, axis=0)                       # (B, L, H)
    inter = wl @ p["w_inter"].T                        # (B, L, C)
    inter = jnp.transpose(inter, (0, 2, 1))            # (B, C, L)
    a1 = jax.nn.relu(inter @ p["w_agg1"].T + p["b_agg1"])
    a2 = a1 @ p["w_agg2"].T + p["b_agg2"]
    agreg = a2.reshape(B, NUM_CLASSES)
    prob = jax.nn.softmax(agreg, axis=1)
    cls = jnp.argmax(prob, axis=1).astype(jnp.int32)
    return agreg, prob, cls


# ------------------------------- main -----------------------------------------
def make_params(key):
    ks = jax.random.split(key, 16)
    u = lambda k, shape, a: jax.random.uniform(
        k, shape, dtype=jnp.float32, minval=-a, maxval=a)
    return {
        "emb":     u(ks[0], (VOCAB, EMB), 0.2),
        # GRU layer 0
        "w_ih0":   u(ks[1], (3 * HID, EMB), 0.1),
        "w_hh0":   u(ks[2], (3 * HID, HID), 0.1),
        "b_ih0":   u(ks[3], (3 * HID,), 0.1),
        "b_hh0":   u(ks[4], (3 * HID,), 0.1),
        # GRU layer 1
        "w_ih1":   u(ks[5], (3 * HID, HID), 0.1),
        "w_hh1":   u(ks[6], (3 * HID, HID), 0.1),
        "b_ih1":   u(ks[7], (3 * HID,), 0.1),
        "b_hh1":   u(ks[8], (3 * HID,), 0.1),
        # heads
        "w_inter": u(ks[9], (NUM_CLASSES, HID), 0.1),
        "w_agg1":  u(ks[10], (2 * MAX_LEN, MAX_LEN), 0.1),
        "b_agg1":  u(ks[11], (2 * MAX_LEN,), 0.1),
        "w_agg2":  u(ks[12], (1, 2 * MAX_LEN), 0.1),
        "b_agg2":  u(ks[13], (1,), 0.1),
    }


if __name__ == "__main__":
    key = jax.random.PRNGKey(0)
    pkey, tkey = jax.random.split(key)
    params = make_params(pkey)
    tokens = jax.random.randint(tkey, (BATCH, MAX_LEN), 0, VOCAB, dtype=jnp.int32)

    agreg, prob, cls = exam_additional_gru_forward(tokens, params)
    jax.block_until_ready((agreg, prob, cls))

    agreg_r, prob_r, cls_r = reference_forward(tokens, params)
    np.testing.assert_allclose(np.asarray(agreg), np.asarray(agreg_r),
                               rtol=1e-4, atol=1e-5)
    np.testing.assert_allclose(np.asarray(prob), np.asarray(prob_r),
                               rtol=1e-4, atol=1e-5)
    np.testing.assert_array_equal(np.asarray(cls), np.asarray(cls_r))

    print("KERNEL_OK")
</pallas_src>

<mosaic_0001>
module attributes {stable_mosaic.version = 11 : i64} {
  func.func @exam_kernel(%arg0: memref<32x16xf32, #tpu.memory_space<vmem>>, %arg1: memref<120x128xf32, #tpu.memory_space<vmem>>, %arg2: memref<104x128xf32, #tpu.memory_space<vmem>>, %arg3: memref<4x10xf32, #tpu.memory_space<vmem>>, %arg4: memref<4x10xf32, #tpu.memory_space<vmem>>, %arg5: memref<4x1xi32, #tpu.memory_space<vmem>>) attributes {dimension_semantics = [], scalar_prefetch = 0 : i64, scratch_operands = 0 : i64, tpu.core_type = #tpu.core_type<tc>} {
    %c0 = arith.constant 0 : index
    %c0_0 = arith.constant 0 : index
    %0 = vector.load %arg1[%c0, %c0_0] : memref<120x128xf32, #tpu.memory_space<vmem>>, vector<16x96xf32>
    %c16 = arith.constant 16 : index
    %c0_1 = arith.constant 0 : index
    %1 = vector.load %arg1[%c16, %c0_1] : memref<120x128xf32, #tpu.memory_space<vmem>>, vector<32x96xf32>
    %c48 = arith.constant 48 : index
    %c0_2 = arith.constant 0 : index
    %2 = vector.load %arg1[%c48, %c0_2] : memref<120x128xf32, #tpu.memory_space<vmem>>, vector<64x128xf32>
    %c112 = arith.constant 112 : index
    %c0_3 = arith.constant 0 : index
    %3 = vector.load %arg1[%c112, %c0_3] : memref<120x128xf32, #tpu.memory_space<vmem>>, vector<1x96xf32>
    %c113 = arith.constant 113 : index
    %c0_4 = arith.constant 0 : index
    %4 = vector.load %arg1[%c113, %c0_4] : memref<120x128xf32, #tpu.memory_space<vmem>>, vector<1x32xf32>
    %c114 = arith.constant 114 : index
    %c0_5 = arith.constant 0 : index
    %5 = vector.load %arg1[%c114, %c0_5] : memref<120x128xf32, #tpu.memory_space<vmem>>, vector<1x128xf32>
    %6 = vector.shape_cast %4 : vector<1x32xf32> to vector<1x32xf32>
    %7 = vector.broadcast %6 : vector<1x32xf32> to vector<8x32xf32>
    %8 = vector.shape_cast %5 : vector<1x128xf32> to vector<1x128xf32>
    %9 = vector.broadcast %8 : vector<1x128xf32> to vector<8x128xf32>
    %c0_6 = arith.constant 0 : index
    %c0_7 = arith.constant 0 : index
    %10 = vector.load %arg0[%c0_6, %c0_7] : memref<32x16xf32, #tpu.memory_space<vmem>>, vector<32x16xf32>
    %cst = arith.constant dense<0.000000e+00> : vector<32x96xf32>
    %11 = tpu.matmul %10, %0, %cst {dimension_numbers = #tpu.dot_dimension_numbers<[1], [0], [0], [1], [0, 0, 1, 1], [], []>} : vector<32x16xf32>, vector<16x96xf32>, vector<32x96xf32> -> vector<32x96xf32>
    %12 = vector.broadcast %3 : vector<1x96xf32> to vector<32x96xf32>
    %13 = arith.addf %11, %12 : vector<32x96xf32>
    %cst_8 = arith.constant 0.000000e+00 : f32
    %14 = vector.broadcast %cst_8 : f32 to vector<8x32xf32>
    %cst_9 = arith.constant 0.000000e+00 : f32
    %15 = vector.broadcast %cst_9 : f32 to vector<8x32xf32>
    %16 = vector.extract_strided_slice %13 {offsets = [0, 0], sizes = [8, 96], strides = [1, 1]} : vector<32x96xf32> to vector<8x96xf32>
    %cst_10 = arith.constant dense<0.000000e+00> : vector<8x96xf32>
    %17 = tpu.matmul %14, %1, %cst_10 {dimension_numbers = #tpu.dot_dimension_numbers<[1], [0], [0], [1], [0, 0, 1, 1], [], []>} : vector<8x32xf32>, vector<32x96xf32>, vector<8x96xf32> -> vector<8x96xf32>
    %18 = vector.extract_strided_slice %16 {offsets = [0, 0], sizes = [8, 64], strides = [1, 1]} : vector<8x96xf32> to vector<8x64xf32>
    %19 = vector.extract_strided_slice %17 {offsets = [0, 0], sizes = [8, 64], strides = [1, 1]} : vector<8x96xf32> to vector<8x64xf32>
    %20 = arith.addf %18, %19 : vector<8x64xf32>
    %21 = arith.negf %20 : vector<8x64xf32>
    %22 = math.exp %21 : vector<8x64xf32>
    %cst_11 = arith.constant 1.000000e+00 : f32
    %23 = vector.broadcast %cst_11 : f32 to vector<8x64xf32>
    %24 = arith.addf %23, %22 : vector<8x64xf32>
    %25 = arith.divf %23, %24 : vector<8x64xf32>
    %26 = vector.extract_strided_slice %25 {offsets = [0, 0], sizes = [8, 32], strides = [1, 1]} : vector<8x64xf32> to vector<8x32xf32>
    %27 = vector.extract_strided_slice %25 {offsets = [0, 32], sizes = [8, 32], strides = [1, 1]} : vector<8x64xf32> to vector<8x32xf32>
    %28 = vector.extract_strided_slice %16 {offsets = [0, 64], sizes = [8, 32], strides = [1, 1]} : vector<8x96xf32> to vector<8x32xf32>
    %29 = vector.extract_strided_slice %17 {offsets = [0, 64], sizes = [8, 32], strides = [1, 1]} : vector<8x96xf32> to vector<8x32xf32>
    %30 = arith.addf %29, %7 : vector<8x32xf32>
    %31 = arith.mulf %26, %30 : vector<8x32xf32>
    %32 = arith.addf %28, %31 : vector<8x32xf32>
    %33 = math.tanh %32 : vector<8x32xf32>
    %cst_12 = arith.constant 1.000000e+00 : f32
    %34 = vector.broadcast %cst_12 : f32 to vector<8x32xf32>
    %35 = arith.subf %34, %27 : vector<8x32xf32>
    %36 = arith.mulf %35, %33 : vector<8x32xf32>
    %37 = arith.mulf %27, %14 : vector<8x32xf32>
    %38 = arith.addf %36, %37 : vector<8x32xf32>
    %39 = tpu.concatenate %38, %15 in 1 : vector<8x32xf32>, vector<8x32xf32> -> vector<8x64xf32>
    %cst_13 = arith.constant dense<0.000000e+00> : vector<8x128xf32>
    %40 = tpu.matmul %39, %2, %cst_13 {dimension_numbers = #tpu.dot_dimension_numbers<[1], [0], [0], [1], [0, 0, 1, 1], [], []>} : vector<8x64xf32>, vector<64x128xf32>, vector<8x128xf32> -> vector<8x128xf32>
    %41 = arith.addf %40, %9 : vector<8x128xf32>
    %42 = vector.extract_strided_slice %41 {offsets = [0, 0], sizes = [8, 64], strides = [1, 1]} : vector<8x128xf32> to vector<8x64xf32>
    %43 = arith.negf %42 : vector<8x64xf32>
    %44 = math.exp %43 : vector<8x64xf32>
    %cst_14 = arith.constant 1.000000e+00 : f32
    %45 = vector.broadcast %cst_14 : f32 to vector<8x64xf32>
    %46 = arith.addf %45, %44 : vector<8x64xf32>
    %47 = arith.divf %45, %46 : vector<8x64xf32>
    %48 = vector.extract_strided_slice %47 {offsets = [0, 0], sizes = [8, 32], strides = [1, 1]} : vector<8x64xf32> to vector<8x32xf32>
    %49 = vector.extract_strided_slice %47 {offsets = [0, 32], sizes = [8, 32], strides = [1, 1]} : vector<8x64xf32> to vector<8x32xf32>
    %50 = vector.extract_strided_slice %41 {offsets = [0, 64], sizes = [8, 32], strides = [1, 1]} : vector<8x128xf32> to vector<8x32xf32>
    %51 = vector.extract_strided_slice %41 {offsets = [0, 96], sizes = [8, 32], strides = [1, 1]} : vector<8x128xf32> to vector<8x32xf32>
    %52 = arith.mulf %48, %51 : vector<8x32xf32>
    %53 = arith.addf %50, %52 : vector<8x32xf32>
    %54 = math.tanh %53 : vector<8x32xf32>
    %cst_15 = arith.constant 1.000000e+00 : f32
    %55 = vector.broadcast %cst_15 : f32 to vector<8x32xf32>
    %56 = arith.subf %55, %49 : vector<8x32xf32>
    %57 = arith.mulf %56, %54 : vector<8x32xf32>
    %58 = arith.mulf %49, %15 : vector<8x32xf32>
    %59 = arith.addf %57, %58 : vector<8x32xf32>
    %60 = vector.extract_strided_slice %13 {offsets = [8, 0], sizes = [8, 96], strides = [1, 1]} : vector<32x96xf32> to vector<8x96xf32>
    %cst_16 = arith.constant dense<0.000000e+00> : vector<8x96xf32>
    %61 = tpu.matmul %38, %1, %cst_16 {dimension_numbers = #tpu.dot_dimension_numbers<[1], [0], [0], [1], [0, 0, 1, 1], [], []>} : vector<8x32xf32>, vector<32x96xf32>, vector<8x96xf32> -> vector<8x96xf32>
    %62 = vector.extract_strided_slice %60 {offsets = [0, 0], sizes = [8, 64], strides = [1, 1]} : vector<8x96xf32> to vector<8x64xf32>
    %63 = vector.extract_strided_slice %61 {offsets = [0, 0], sizes = [8, 64], strides = [1, 1]} : vector<8x96xf32> to vector<8x64xf32>
    %64 = arith.addf %62, %63 : vector<8x64xf32>
    %65 = arith.negf %64 : vector<8x64xf32>
    %66 = math.exp %65 : vector<8x64xf32>
    %cst_17 = arith.constant 1.000000e+00 : f32
    %67 = vector.broadcast %cst_17 : f32 to vector<8x64xf32>
    %68 = arith.addf %67, %66 : vector<8x64xf32>
    %69 = arith.divf %67, %68 : vector<8x64xf32>
    %70 = vector.extract_strided_slice %69 {offsets = [0, 0], sizes = [8, 32], strides = [1, 1]} : vector<8x64xf32> to vector<8x32xf32>
    %71 = vector.extract_strided_slice %69 {offsets = [0, 32], sizes = [8, 32], strides = [1, 1]} : vector<8x64xf32> to vector<8x32xf32>
    %72 = vector.extract_strided_slice %60 {offsets = [0, 64], sizes = [8, 32], strides = [1, 1]} : vector<8x96xf32> to vector<8x32xf32>
    %73 = vector.extract_strided_slice %61 {offsets = [0, 64], sizes = [8, 32], strides = [1, 1]} : vector<8x96xf32> to vector<8x32xf32>
    %74 = arith.addf %73, %7 : vector<8x32xf32>
    %75 = arith.mulf %70, %74 : vector<8x32xf32>
    %76 = arith.addf %72, %75 : vector<8x32xf32>
    %77 = math.tanh %76 : vector<8x32xf32>
    %cst_18 = arith.constant 1.000000e+00 : f32
    %78 = vector.broadcast %cst_18 : f32 to vector<8x32xf32>
    %79 = arith.subf %78, %71 : vector<8x32xf32>
    %80 = arith.mulf %79, %77 : vector<8x32xf32>
    %81 = arith.mulf %71, %38 : vector<8x32xf32>
    %82 = arith.addf %80, %81 : vector<8x32xf32>
    %83 = tpu.concatenate %82, %59 in 1 : vector<8x32xf32>, vector<8x32xf32> -> vector<8x64xf32>
    %cst_19 = arith.constant dense<0.000000e+00> : vector<8x128xf32>
    %84 = tpu.matmul %83, %2, %cst_19 {dimension_numbers = #tpu.dot_dimension_numbers<[1], [0], [0], [1], [0, 0, 1, 1], [], []>} : vector<8x64xf32>, vector<64x128xf32>, vector<8x128xf32> -> vector<8x128xf32>
    %85 = arith.addf %84, %9 : vector<8x128xf32>
    %86 = vector.extract_strided_slice %85 {offsets = [0, 0], sizes = [8, 64], strides = [1, 1]} : vector<8x128xf32> to vector<8x64xf32>
    %87 = arith.negf %86 : vector<8x64xf32>
    %88 = math.exp %87 : vector<8x64xf32>
    %cst_20 = arith.constant 1.000000e+00 : f32
    %89 = vector.broadcast %cst_20 : f32 to vector<8x64xf32>
    %90 = arith.addf %89, %88 : vector<8x64xf32>
    %91 = arith.divf %89, %90 : vector<8x64xf32>
    %92 = vector.extract_strided_slice %91 {offsets = [0, 0], sizes = [8, 32], strides = [1, 1]} : vector<8x64xf32> to vector<8x32xf32>
    %93 = vector.extract_strided_slice %91 {offsets = [0, 32], sizes = [8, 32], strides = [1, 1]} : vector<8x64xf32> to vector<8x32xf32>
    %94 = vector.extract_strided_slice %85 {offsets = [0, 64], sizes = [8, 32], strides = [1, 1]} : vector<8x128xf32> to vector<8x32xf32>
    %95 = vector.extract_strided_slice %85 {offsets = [0, 96], sizes = [8, 32], strides = [1, 1]} : vector<8x128xf32> to vector<8x32xf32>
    %96 = arith.mulf %92, %95 : vector<8x32xf32>
    %97 = arith.addf %94, %96 : vector<8x32xf32>
    %98 = math.tanh %97 : vector<8x32xf32>
    %cst_21 = arith.constant 1.000000e+00 : f32
    %99 = vector.broadcast %cst_21 : f32 to vector<8x32xf32>
    %100 = arith.subf %99, %93 : vector<8x32xf32>
    %101 = arith.mulf %100, %98 : vector<8x32xf32>
    %102 = arith.mulf %93, %59 : vector<8x32xf32>
    %103 = arith.addf %101, %102 : vector<8x32xf32>
    %104 = vector.extract_strided_slice %13 {offsets = [16, 0], sizes = [8, 96], strides = [1, 1]} : vector<32x96xf32> to vector<8x96xf32>
    %cst_22 = arith.constant dense<0.000000e+00> : vector<8x96xf32>
    %105 = tpu.matmul %82, %1, %cst_22 {dimension_numbers = #tpu.dot_dimension_numbers<[1], [0], [0], [1], [0, 0, 1, 1], [], []>} : vector<8x32xf32>, vector<32x96xf32>, vector<8x96xf32> -> vector<8x96xf32>
    %106 = vector.extract_strided_slice %104 {offsets = [0, 0], sizes = [8, 64], strides = [1, 1]} : vector<8x96xf32> to vector<8x64xf32>
    %107 = vector.extract_strided_slice %105 {offsets = [0, 0], sizes = [8, 64], strides = [1, 1]} : vector<8x96xf32> to vector<8x64xf32>
    %108 = arith.addf %106, %107 : vector<8x64xf32>
    %109 = arith.negf %108 : vector<8x64xf32>
    %110 = math.exp %109 : vector<8x64xf32>
    %cst_23 = arith.constant 1.000000e+00 : f32
    %111 = vector.broadcast %cst_23 : f32 to vector<8x64xf32>
    %112 = arith.addf %111, %110 : vector<8x64xf32>
    %113 = arith.divf %111, %112 : vector<8x64xf32>
    %114 = vector.extract_strided_slice %113 {offsets = [0, 0], sizes = [8, 32], strides = [1, 1]} : vector<8x64xf32> to vector<8x32xf32>
    %115 = vector.extract_strided_slice %113 {offsets = [0, 32], sizes = [8, 32], strides = [1, 1]} : vector<8x64xf32> to vector<8x32xf32>
    %116 = vector.extract_strided_slice %104 {offsets = [0, 64], sizes = [8, 32], strides = [1, 1]} : vector<8x96xf32> to vector<8x32xf32>
    %117 = vector.extract_strided_slice %105 {offsets = [0, 64], sizes = [8, 32], strides = [1, 1]} : vector<8x96xf32> to vector<8x32xf32>
    %118 = arith.addf %117, %7 : vector<8x32xf32>
    %119 = arith.mulf %114, %118 : vector<8x32xf32>
    %120 = arith.addf %116, %119 : vector<8x32xf32>
    %121 = math.tanh %120 : vector<8x32xf32>
    %cst_24 = arith.constant 1.000000e+00 : f32
    %122 = vector.broadcast %cst_24 : f32 to vector<8x32xf32>
    %123 = arith.subf %122, %115 : vector<8x32xf32>
    %124 = arith.mulf %123, %121 : vector<8x32xf32>
    %125 = arith.mulf %115, %82 : vector<8x32xf32>
    %126 = arith.addf %124, %125 : vector<8x32xf32>
    %127 = tpu.concatenate %126, %103 in 1 : vector<8x32xf32>, vector<8x32xf32> -> vector<8x64xf32>
    %cst_25 = arith.constant dense<0.000000e+00> : vector<8x128xf32>
    %128 = tpu.matmul %127, %2, %cst_25 {dimension_numbers = #tpu.dot_dimension_numbers<[1], [0], [0], [1], [0, 0, 1, 1], [], []>} : vector<8x64xf32>, vector<64x128xf32>, vector<8x128xf32> -> vector<8x128xf32>
    %129 = arith.addf %128, %9 : vector<8x128xf32>
    %130 = vector.extract_strided_slice %129 {offsets = [0, 0], sizes = [8, 64], strides = [1, 1]} : vector<8x128xf32> to vector<8x64xf32>
    %131 = arith.negf %130 : vector<8x64xf32>
    %132 = math.exp %131 : vector<8x64xf32>
    %cst_26 = arith.constant 1.000000e+00 : f32
    %133 = vector.broadcast %cst_26 : f32 to vector<8x64xf32>
    %134 = arith.addf %133, %132 : vector<8x64xf32>
    %135 = arith.divf %133, %134 : vector<8x64xf32>
    %136 = vector.extract_strided_slice %135 {offsets = [0, 0], sizes = [8, 32], strides = [1, 1]} : vector<8x64xf32> to vector<8x32xf32>
    %137 = vector.extract_strided_slice %135 {offsets = [0, 32], sizes = [8, 32], strides = [1, 1]} : vector<8x64xf32> to vector<8x32xf32>
    %138 = vector.extract_strided_slice %129 {offsets = [0, 64], sizes = [8, 32], strides = [1, 1]} : vector<8x128xf32> to vector<8x32xf32>
    %139 = vector.extract_strided_slice %129 {offsets = [0, 96], sizes = [8, 32], strides = [1, 1]} : vector<8x128xf32> to vector<8x32xf32>
    %140 = arith.mulf %136, %139 : vector<8x32xf32>
    %141 = arith.addf %138, %140 : vector<8x32xf32>
    %142 = math.tanh %141 : vector<8x32xf32>
    %cst_27 = arith.constant 1.000000e+00 : f32
    %143 = vector.broadcast %cst_27 : f32 to vector<8x32xf32>
    %144 = arith.subf %143, %137 : vector<8x32xf32>
    %145 = arith.mulf %144, %142 : vector<8x32xf32>
    %146 = arith.mulf %137, %103 : vector<8x32xf32>
    %147 = arith.addf %145, %146 : vector<8x32xf32>
    %148 = vector.extract_strided_slice %13 {offsets = [24, 0], sizes = [8, 96], strides = [1, 1]} : vector<32x96xf32> to vector<8x96xf32>
    %cst_28 = arith.constant dense<0.000000e+00> : vector<8x96xf32>
    %149 = tpu.matmul %126, %1, %cst_28 {dimension_numbers = #tpu.dot_dimension_numbers<[1], [0], [0], [1], [0, 0, 1, 1], [], []>} : vector<8x32xf32>, vector<32x96xf32>, vector<8x96xf32> -> vector<8x96xf32>
    %150 = vector.extract_strided_slice %148 {offsets = [0, 0], sizes = [8, 64], strides = [1, 1]} : vector<8x96xf32> to vector<8x64xf32>
    %151 = vector.extract_strided_slice %149 {offsets = [0, 0], sizes = [8, 64], strides = [1, 1]} : vector<8x96xf32> to vector<8x64xf32>
    %152 = arith.addf %150, %151 : vector<8x64xf32>
    %153 = arith.negf %152 : vector<8x64xf32>
    %154 = math.exp %153 : vector<8x64xf32>
    %cst_29 = arith.constant 1.000000e+00 : f32
    %155 = vector.broadcast %cst_29 : f32 to vector<8x64xf32>
    %156 = arith.addf %155, %154 : vector<8x64xf32>
    %157 = arith.divf %155, %156 : vector<8x64xf32>
    %158 = vector.extract_strided_slice %157 {offsets = [0, 0], sizes = [8, 32], strides = [1, 1]} : vector<8x64xf32> to vector<8x32xf32>
    %159 = vector.extract_strided_slice %157 {offsets = [0, 32], sizes = [8, 32], strides = [1, 1]} : vector<8x64xf32> to vector<8x32xf32>
    %160 = vector.extract_strided_slice %148 {offsets = [0, 64], sizes = [8, 32], strides = [1, 1]} : vector<8x96xf32> to vector<8x32xf32>
    %161 = vector.extract_strided_slice %149 {offsets = [0, 64], sizes = [8, 32], strides = [1, 1]} : vector<8x96xf32> to vector<8x32xf32>
    %162 = arith.addf %161, %7 : vector<8x32xf32>
    %163 = arith.mulf %158, %162 : vector<8x32xf32>
    %164 = arith.addf %160, %163 : vector<8x32xf32>
    %165 = math.tanh %164 : vector<8x32xf32>
    %cst_30 = arith.constant 1.000000e+00 : f32
    %166 = vector.broadcast %cst_30 : f32 to vector<8x32xf32>
    %167 = arith.subf %166, %159 : vector<8x32xf32>
    %168 = arith.mulf %167, %165 : vector<8x32xf32>
    %169 = arith.mulf %159, %126 : vector<8x32xf32>
    %170 = arith.addf %168, %169 : vector<8x32xf32>
    %171 = tpu.concatenate %170, %147 in 1 : vector<8x32xf32>, vector<8x32xf32> -> vector<8x64xf32>
    %cst_31 = arith.constant dense<0.000000e+00> : vector<8x128xf32>
    %172 = tpu.matmul %171, %2, %cst_31 {dimension_numbers = #tpu.dot_dimension_numbers<[1], [0], [0], [1], [0, 0, 1, 1], [], []>} : vector<8x64xf32>, vector<64x128xf32>, vector<8x128xf32> -> vector<8x128xf32>
    %173 = arith.addf %172, %9 : vector<8x128xf32>
    %174 = vector.extract_strided_slice %173 {offsets = [0, 0], sizes = [8, 64], strides = [1, 1]} : vector<8x128xf32> to vector<8x64xf32>
    %175 = arith.negf %174 : vector<8x64xf32>
    %176 = math.exp %175 : vector<8x64xf32>
    %cst_32 = arith.constant 1.000000e+00 : f32
    %177 = vector.broadcast %cst_32 : f32 to vector<8x64xf32>
    %178 = arith.addf %177, %176 : vector<8x64xf32>
    %179 = arith.divf %177, %178 : vector<8x64xf32>
    %180 = vector.extract_strided_slice %179 {offsets = [0, 0], sizes = [8, 32], strides = [1, 1]} : vector<8x64xf32> to vector<8x32xf32>
    %181 = vector.extract_strided_slice %179 {offsets = [0, 32], sizes = [8, 32], strides = [1, 1]} : vector<8x64xf32> to vector<8x32xf32>
    %182 = vector.extract_strided_slice %173 {offsets = [0, 64], sizes = [8, 32], strides = [1, 1]} : vector<8x128xf32> to vector<8x32xf32>
    %183 = vector.extract_strided_slice %173 {offsets = [0, 96], sizes = [8, 32], strides = [1, 1]} : vector<8x128xf32> to vector<8x32xf32>
    %184 = arith.mulf %180, %183 : vector<8x32xf32>
    %185 = arith.addf %182, %184 : vector<8x32xf32>
    %186 = math.tanh %185 : vector<8x32xf32>
    %cst_33 = arith.constant 1.000000e+00 : f32
    %187 = vector.broadcast %cst_33 : f32 to vector<8x32xf32>
    %188 = arith.subf %187, %181 : vector<8x32xf32>
    %189 = arith.mulf %188, %186 : vector<8x32xf32>
    %190 = arith.mulf %181, %147 : vector<8x32xf32>
    %191 = arith.addf %189, %190 : vector<8x32xf32>
    %192 = tpu.concatenate %59, %103, %147, %191 in 0 : vector<8x32xf32>, vector<8x32xf32>, vector<8x32xf32>, vector<8x32xf32> -> vector<32x32xf32>
    %c0_34 = arith.constant 0 : index
    %c0_35 = arith.constant 0 : index
    %193 = vector.load %arg2[%c0_34, %c0_35] : memref<104x128xf32, #tpu.memory_space<vmem>>, vector<32x10xf32>
    %cst_36 = arith.constant dense<0.000000e+00> : vector<32x10xf32>
    %194 = tpu.matmul %192, %193, %cst_36 {dimension_numbers = #tpu.dot_dimension_numbers<[1], [0], [0], [1], [0, 0, 1, 1], [], []>} : vector<32x32xf32>, vector<32x10xf32>, vector<32x10xf32> -> vector<32x10xf32>
    %c32 = arith.constant 32 : index
    %c0_37 = arith.constant 0 : index
    %195 = vector.load %arg2[%c32, %c0_37] : memref<104x128xf32, #tpu.memory_space<vmem>>, vector<64x33xf32>
    %196 = vector.extract_strided_slice %195 {offsets = [0, 0], sizes = [64, 32], strides = [1, 1]} : vector<64x33xf32> to vector<64x32xf32>
    %197 = vector.extract_strided_slice %195 {offsets = [0, 32], sizes = [64, 1], strides = [1, 1]} : vector<64x33xf32> to vector<64x1xf32>
    %cst_38 = arith.constant dense<0.000000e+00> : vector<64x10xf32>
    %198 = tpu.matmul %196, %194, %cst_38 {dimension_numbers = #tpu.dot_dimension_numbers<[1], [0], [0], [1], [0, 0, 1, 1], [], []>} : vector<64x32xf32>, vector<32x10xf32>, vector<64x10xf32> -> vector<64x10xf32>
    %199 = vector.broadcast %197 : vector<64x1xf32> to vector<64x10xf32>
    %200 = arith.addf %198, %199 : vector<64x10xf32>
    %cst_39 = arith.constant 0.000000e+00 : f32
    %201 = vector.broadcast %cst_39 : f32 to vector<64x10xf32>
    %202 = arith.maximumf %200, %201 : vector<64x10xf32>
    %c96 = arith.constant 96 : index
    %c0_40 = arith.constant 0 : index
    %203 = vector.load %arg2[%c96, %c0_40] : memref<104x128xf32, #tpu.memory_space<vmem>>, vector<4x65xf32>
    %204 = vector.extract_strided_slice %203 {offsets = [0, 0], sizes = [4, 64], strides = [1, 1]} : vector<4x65xf32> to vector<4x64xf32>
    %205 = vector.extract_strided_slice %203 {offsets = [0, 64], sizes = [1, 1], strides = [1, 1]} : vector<4x65xf32> to vector<1x1xf32>
    %cst_41 = arith.constant dense<0.000000e+00> : vector<4x10xf32>
    %206 = tpu.matmul %204, %202, %cst_41 {dimension_numbers = #tpu.dot_dimension_numbers<[1], [0], [0], [1], [0, 0, 1, 1], [], []>} : vector<4x64xf32>, vector<64x10xf32>, vector<4x10xf32> -> vector<4x10xf32>
    %207 = vector.broadcast %205 : vector<1x1xf32> to vector<4x10xf32>
    %208 = arith.addf %206, %207 : vector<4x10xf32>
    %c0_42 = arith.constant 0 : index
    %c0_43 = arith.constant 0 : index
    %209 = vector.load %arg3[%c0_42, %c0_43] : memref<4x10xf32, #tpu.memory_space<vmem>>, vector<4x10xf32>
    tpu.vector_store %arg3[%c0_42, %c0_43], %208 {strides = array<i32>} : memref<4x10xf32, #tpu.memory_space<vmem>>, vector<4x10xf32>,
    %cst_44 = arith.constant dense<0xFF800000> : vector<4xf32>
    %210 = vector.multi_reduction <maximumf>, %208, %cst_44 [1] : vector<4x10xf32> to vector<4xf32>
    %211 = vector.shape_cast %210 : vector<4xf32> to vector<4x1xf32>
    %212 = vector.broadcast %211 : vector<4x1xf32> to vector<4x10xf32>
    %213 = arith.subf %208, %212 : vector<4x10xf32>
    %214 = math.exp %213 : vector<4x10xf32>
    %cst_45 = arith.constant dense<0.000000e+00> : vector<4xf32>
    %215 = vector.multi_reduction <add>, %214, %cst_45 [1] : vector<4x10xf32> to vector<4xf32>
    %216 = vector.shape_cast %215 : vector<4xf32> to vector<4x1xf32>
    %217 = vector.broadcast %216 : vector<4x1xf32> to vector<4x10xf32>
    %218 = arith.divf %214, %217 : vector<4x10xf32>
    %c0_46 = arith.constant 0 : index
    %c0_47 = arith.constant 0 : index
    %219 = vector.load %arg4[%c0_46, %c0_47] : memref<4x10xf32, #tpu.memory_space<vmem>>, vector<4x10xf32>
    tpu.vector_store %arg4[%c0_46, %c0_47], %218 {strides = array<i32>} : memref<4x10xf32, #tpu.memory_space<vmem>>, vector<4x10xf32>,
    %220 = tpu.iota {dimensions = array<i32: 1>} : vector<4x10xi32>
    %221 = vector.broadcast %211 : vector<4x1xf32> to vector<4x10xf32>
    %222 = arith.cmpf oeq, %208, %221 : vector<4x10xf32>
    %c10_i32 = arith.constant 10 : i32
    %223 = vector.broadcast %c10_i32 : i32 to vector<4x10xi32>
    %224 = arith.select %222, %220, %223 : vector<4x10xi1>, vector<4x10xi32>
    %cst_48 = arith.constant dense<2147483647> : vector<4xi32>
    %225 = vector.multi_reduction <minsi>, %224, %cst_48 [1] : vector<4x10xi32> to vector<4xi32>
    %226 = vector.shape_cast %225 : vector<4xi32> to vector<4x1xi32>
    %c0_49 = arith.constant 0 : index
    %c0_50 = arith.constant 0 : index
    %227 = vector.load %arg5[%c0_49, %c0_50] : memref<4x1xi32, #tpu.memory_space<vmem>>, vector<4x1xi32>
    tpu.vector_store %arg5[%c0_49, %c0_50], %226 {strides = array<i32>} : memref<4x1xi32, #tpu.memory_space<vmem>>, vector<4x1xi32>,
    return
  }
}

</mosaic_0001>

<llo_original>
// kernel: tpu_custom_call.1
$region0: #{tpu_custom_call.1}
  #allocation0 [shape = 'u32[]', space=smem, size = 0x4, offset = 0x4, fixed_abs, tag = 'smem constant byte address 0x4 - core index']
  #allocation1 [shape = 'u32[72,128]{1,0:T(1,128)}', space=vmem, size = 0x9000, scoped, tag = 'internal scratch']
  %s0 = inlined_call_operand.vmem [shape: f32[32,16], index: 0, kind: input, shape index: {}]
  %s1 = inlined_call_operand.hbm [shape: f32[120,128], index: 1, kind: input, shape index: {}]
  %s2 = inlined_call_operand.hbm [shape: f32[104,128], index: 2, kind: input, shape index: {}]
  %s3 = inlined_call_operand.hbm [shape: f32[4,10], index: 3, kind: output, shape index: {0}]
  %s4 = inlined_call_operand.hbm [shape: f32[4,10], index: 4, kind: output, shape index: {1}]
  %s5 = inlined_call_operand.vmem [shape: s32[4,1], index: 5, kind: output, shape index: {2}]
  %6 = xla_tuple %s3, %s4, %s5
  %s7 = sld [smem:[#allocation0]]
  $region46: #{tpu_custom_call.1} parent=0
    _
  %s9 = ssub.s32 1, %s7
  %s10 = scalar_select 0, %s9, %s7
  $region1: #{tpu_custom_call.1} parent=0
    #allocation2 [shape = 'u8[61440]{0}', space=vmem, size = 0xf000, scoped, tag = 'input window, operand 1, single buffered']
    #allocation3 [shape = 's32[1]{0}', space=sflag, size = 0x4, scoped, tag = 'scoped memory for tpu_custom_call.1']
    #allocation4 [shape = 's32[1]{0}', space=sflag, size = 0x4, scoped, tag = 'scoped memory for tpu_custom_call.1']
    #allocation5 [shape = 'u8[53248]{0}', space=vmem, size = 0xd000, scoped, tag = 'input window, operand 2, single buffered']
    #allocation6 [shape = 's32[1]{0}', space=sflag, size = 0x4, scoped, tag = 'scoped memory for tpu_custom_call.1']
    #allocation7 [shape = 'u8[2048]{0}', space=vmem, size = 0x800, scoped, tag = 'output window, operand 0, single buffered']
    #allocation8 [shape = 'u8[2048]{0}', space=vmem, size = 0x800, scoped, tag = 'output window, operand 1, single buffered']
    #allocation9 [shape = 's32[1]{0}', space=sflag, size = 0x4, scoped, tag = 'scoped memory for tpu_custom_call.1']
    %11 = vsyncpa [#allocation3], 0
    %12 = vsyncpa [#allocation6], 0
    %13 = vsyncpa [#allocation4], 0
    %14 = vsyncpa [#allocation9], 0
    // Predicated region
    $region2: #{tpu_custom_call.1} parent=1 // pred_check
      _
    $region3: #{tpu_custom_call.1} parent=1 // pred_check_branch
      %16 = sbr.rel (0) target = $region5
    $region4: #{tpu_custom_call.1} parent=1 // pred_region
      _
    $region5: #{tpu_custom_call.1} parent=1 // pred_fallthru
      _
    // Predicated region
    $region6: #{tpu_custom_call.1} parent=1 // pred_check
      _
    $region7: #{tpu_custom_call.1} parent=1 // pred_check_branch
      %18 = sbr.rel (0) target = $region9
    $region8: #{tpu_custom_call.1} parent=1 // pred_region
      %20 = vsyncadd [#allocation3], 0
      %s21 = sshll.u32 %s1, 4
      %s22 = int_to_ptr.hbm [resolvable:$true] %s21
      %s23 = sshll.u32 [#allocation2], 4
      %s24 = int_to_ptr.vmem [resolvable:$true] %s23
      %29 = dma.hbm_to_vmem [thread:$0]  %s22, 1920, %s24, [#allocation3], 128, 128, 8
    $region9: #{tpu_custom_call.1} parent=1 // pred_fallthru
      _
    // Predicated region
    $region10: #{tpu_custom_call.1} parent=1 // pred_check
      _
    $region11: #{tpu_custom_call.1} parent=1 // pred_check_branch
      %31 = sbr.rel (0) target = $region13
    $region12: #{tpu_custom_call.1} parent=1 // pred_region
      %33 = vsyncadd [#allocation6], 0
      %s34 = sshll.u32 %s2, 4
      %s35 = int_to_ptr.hbm [resolvable:$true] %s34
      %s36 = sshll.u32 [#allocation5], 4
      %s37 = int_to_ptr.vmem [resolvable:$true] %s36
      %42 = dma.hbm_to_vmem [thread:$0]  %s35, 1664, %s37, [#allocation6], 128, 128, 8
    $region13: #{tpu_custom_call.1} parent=1 // pred_fallthru
      _
    // Predicated region
    $region14: #{tpu_custom_call.1} parent=1 // pred_check
      _
    $region15: #{tpu_custom_call.1} parent=1 // pred_check_branch
      %44 = sbr.rel (0) target = $region17
    $region16: #{tpu_custom_call.1} parent=1 // pred_region
      %46 = dma.done [#allocation3], 1920
    $region17: #{tpu_custom_call.1} parent=1 // pred_fallthru
      _
    // Predicated region
    $region18: #{tpu_custom_call.1} parent=1 // pred_check
      _
    $region19: #{tpu_custom_call.1} parent=1 // pred_check_branch
      %48 = sbr.rel (0) target = $region21
    $region20: #{tpu_custom_call.1} parent=1 // pred_region
      %50 = dma.done [#allocation6], 1664
    $region21: #{tpu_custom_call.1} parent=1 // pred_fallthru
      _
    %v51 = vld [vmem:[#allocation2] sm:$0xff]
    %v52 = vld [vmem:[#allocation2 + $0x8] sm:$0xff]
    %v53 = vld [vmem:[#allocation2 + $0x10] sm:$0xff]
    %v54 = vld [vmem:[#allocation2 + $0x18] sm:$0xff]
    %v55 = vld [vmem:[#allocation2 + $0x20] sm:$0xff]
    %v56 = vld [vmem:[#allocation2 + $0x28] sm:$0xff]
    %v57 = vld [vmem:[#allocation2 + $0x30] sm:$0xff]
    %v58 = vld [vmem:[#allocation2 + $0x38] sm:$0xff]
    %v59 = vld [vmem:[#allocation2 + $0x40] sm:$0xff]
    %v60 = vld [vmem:[#allocation2 + $0x48] sm:$0xff]
    %v61 = vld [vmem:[#allocation2 + $0x50] sm:$0xff]
    %v62 = vld [vmem:[#allocation2 + $0x58] sm:$0xff]
    %v63 = vld [vmem:[#allocation2 + $0x60] sm:$0xff]
    %v64 = vld [vmem:[#allocation2 + $0x68] sm:$0xff]
    %v65 = vld [vmem:[#allocation2 + $0x70] sm:$0x1]
    %v66 = vld [vmem:[#allocation2 + $0x71] sm:$0x1]
    %v67 = vld [vmem:[#allocation2 + $0x72] sm:$0x1]
    %v68 = vperm.slane %v66, 0
    %v69 = vperm.slane %v67, 0
    %v70 = vld [vmem:[%s0] sm:$0xff]
    %v71 = vld [vmem:[%s0 + $0x8] sm:$0xff]
    %v72 = vld [vmem:[%s0 + $0x10] sm:$0xff]
    %v73 = vld [vmem:[%s0 + $0x18] sm:$0xff]
    %v74 = vperm.slane %v65, 0
    %vm75 = vcmask 130048
    %v77 = vsel %vm75, %v70, 0
    %v80 = vsel %vm75, %v71, 0
    %v83 = vsel %vm75, %v72, 0
    %v86 = vsel %vm75, %v73, 0
    %88 = vmatpush.msra.mxu0 0.0
    %89 = vmatpush.msra.mxu0 0.0
    %90 = vmatpush.msra.mxu0 0.0
    %91 = vmatpush.msra.mxu0 0.0
    %92 = vmatpush.msra.mxu0 0.0
    %93 = vmatpush.msra.mxu0 0.0
    %94 = vmatpush.msra.mxu0 0.0
    %95 = vmatpush.msra.mxu0 0.0
    %96 = vmatpush.msra.mxu0 0.0
    %97 = vmatpush.msra.mxu0 0.0
    %98 = vmatpush.msra.mxu0 0.0
    %99 = vmatpush.msra.mxu0 0.0
    %100 = vmatpush.msra.mxu0 0.0
    %101 = vmatpush.msra.mxu0 0.0
    %102 = vmatpush.msra.mxu0 %v52
    %103 = vmatpush.msra.mxu0 %v51
    %104 = vmatmul.f32.gmra.mxu0 %v77
    %v105 = vpop.f32.mrf.mxu0
    %v106 = vadd.f32 %v74, %v105
    %107 = vmatmul.f32.gmra.mxu0 %v80
    %v108 = vpop.f32.mrf.mxu0
    %v109 = vadd.f32 %v74, %v108
    %110 = vmatmul.f32.gmra.mxu0 %v83
    %v111 = vpop.f32.mrf.mxu0
    %v112 = vadd.f32 %v74, %v111
    %113 = vmatmul.f32.gmra.mxu0 %v86
    %v114 = vpop.f32.mrf.mxu0
    %v115 = vadd.f32 %v74, %v114
    %116 = vdwg.mxu0
    %vm117 = vcmask 261120
    %v119 = vsel %vm117, 0.0, 0
    %121 = vmatpush.msra.mxu0 0.0
    %122 = vmatpush.msra.mxu0 0.0
    %123 = vmatpush.msra.mxu0 0.0
    %124 = vmatpush.msra.mxu0 0.0
    %125 = vmatpush.msra.mxu0 0.0
    %126 = vmatpush.msra.mxu0 0.0
    %127 = vmatpush.msra.mxu0 0.0
    %128 = vmatpush.msra.mxu0 0.0
    %129 = vmatpush.msra.mxu0 0.0
    %130 = vmatpush.msra.mxu0 0.0
    %131 = vmatpush.msra.mxu0 0.0
    %132 = vmatpush.msra.mxu0 0.0
    %133 = vmatpush.msra.mxu0 %v56
    %134 = vmatpush.msra.mxu0 %v55
    %135 = vmatpush.msra.mxu0 %v54
    %136 = vmatpush.msra.mxu0 %v53
    %137 = vmatmul.f32.gmra.mxu0 %v119
    %v138 = vpop.f32.mrf.mxu0
    %v139 = vadd.f32 0.0, %v138
    %140 = vdwg.mxu0
    %v141 = vadd.f32 %v106, %v139
    %v142 = vxor.u32 %v141, 2147483648
    %v143 = vmul.f32 %v142, 1.442695
    %v144 = vpow.pop %v143
    %v145 = vadd.f32 %v144, 1.0
    %v146 = vrcp.pop %v145
    %v147 = vmul.f32 %v145, %v146
    %v148 = vsub.f32 1.0, %v147
    %v149 = vmul.f32 %v146, %v148
    %v150 = vadd.f32 %v146, %v149
    %vm151 = vweird.f32 %v145
    %vm152 = vweird.f32 %v146
    %vm153 = vmor %vm151, %vm152
    %v154 = vsel %vm153, %v146, %v150
    %v155 = vand.u32 2147483647, %v145
    %vm156 = vcmp.eq.f32.partialorder %v155, 8.507059e+37
    %v157 = vand.u32 %v145, 2147483648
    %v158 = vor.u32 1.1754944e-38, %v157
    %v159 = vsel %vm156, %v158, %v154
    %v160 = vmul.f32 1.0, %v159
    %162 = vrot.lane.b32.xlu0 %v68, 64
    %v163 = vpop.permute.xlu0 %162
    %v165 = vadd.f32 %v139, %v163
    %167 = vrot.lane.b32.xlu0 %v165, 64
    %v168 = vpop.permute.xlu0 %167
    %v170 = vmul.f32 %v160, %v168
    %172 = vrot.lane.b32.xlu0 %v170, 64
    %v173 = vpop.permute.xlu0 %172
    %v175 = vadd.f32 %v106, %v173
    %v176 = vtanh.pop %v175
    %v177 = vsub.f32 1.0, %v160
    %179 = vrot.lane.b32.xlu0 %v176, 96
    %v180 = vpop.permute.xlu0 %179
    %v182 = vmul.f32 %v177, %v180
    %v183 = vmul.f32 %v160, 0.0
    %v184 = vadd.f32 %v182, %v183
    %186 = vrot.lane.b32.xlu0 %v184, 96
    %v187 = vpop.permute.xlu0 %186
    %v189 = vsel %vm117, %v187, 0.0
    %vm190 = vcmask 523264
    %v192 = vsel %vm190, %v189, 0
    %194 = vmatpush.msra.mxu0 0.0
    %195 = vmatpush.msra.mxu0 0.0
    %196 = vmatpush.msra.mxu0 0.0
    %197 = vmatpush.msra.mxu0 0.0
    %198 = vmatpush.msra.mxu0 0.0
    %199 = vmatpush.msra.mxu0 0.0
    %200 = vmatpush.msra.mxu0 0.0
    %201 = vmatpush.msra.mxu0 0.0
    %202 = vmatpush.msra.mxu0 %v64
    %203 = vmatpush.msra.mxu0 %v63
    %204 = vmatpush.msra.mxu0 %v62
    %205 = vmatpush.msra.mxu0 %v61
    %206 = vmatpush.msra.mxu0 %v60
    %207 = vmatpush.msra.mxu0 %v59
    %208 = vmatpush.msra.mxu0 %v58
    %209 = vmatpush.msra.mxu0 %v57
    %210 = vmatmul.f32.gmra.mxu0 %v192
    %v211 = vpop.f32.mrf.mxu0
    %v212 = vadd.f32 %v69, %v211
    %213 = vdwg.mxu0
    %v214 = vxor.u32 %v212, 2147483648
    %v215 = vmul.f32 %v214, 1.442695
    %v216 = vpow.pop %v215
    %v217 = vadd.f32 %v216, 1.0
    %v218 = vrcp.pop %v217
    %v219 = vmul.f32 %v217, %v218
    %v220 = vsub.f32 1.0, %v219
    %v221 = vmul.f32 %v218, %v220
    %v222 = vadd.f32 %v218, %v221
    %vm223 = vweird.f32 %v217
    %vm224 = vweird.f32 %v218
    %vm225 = vmor %vm223, %vm224
    %v226 = vsel %vm225, %v218, %v222
    %v227 = vand.u32 2147483647, %v217
    %vm228 = vcmp.eq.f32.partialorder %v227, 8.507059e+37
    %v229 = vand.u32 %v217, 2147483648
    %v230 = vor.u32 1.1754944e-38, %v229
    %v231 = vsel %vm228, %v230, %v226
    %v232 = vmul.f32 1.0, %v231
    %234 = vrot.lane.b32.xlu0 %v212, 32
    %v235 = vpop.permute.xlu0 %234
    %v237 = vmul.f32 %v232, %v235
    %239 = vrot.lane.b32.xlu0 %v237, 64
    %v240 = vpop.permute.xlu0 %239
    %v242 = vadd.f32 %v212, %v240
    %v243 = vtanh.pop %v242
    %v244 = vsub.f32 1.0, %v232
    %246 = vrot.lane.b32.xlu0 %v243, 96
    %v247 = vpop.permute.xlu0 %246
    %v249 = vmul.f32 %v244, %v247
    %v250 = vmul.f32 %v232, 0.0
    %v251 = vadd.f32 %v249, %v250
    %v252 = vsel %vm117, %v187, 0
    %254 = vmatpush.msra.mxu0 0.0
    %255 = vmatpush.msra.mxu0 0.0
    %256 = vmatpush.msra.mxu0 0.0
    %257 = vmatpush.msra.mxu0 0.0
    %258 = vmatpush.msra.mxu0 0.0
    %259 = vmatpush.msra.mxu0 0.0
    %260 = vmatpush.msra.mxu0 0.0
    %261 = vmatpush.msra.mxu0 0.0
    %262 = vmatpush.msra.mxu0 0.0
    %263 = vmatpush.msra.mxu0 0.0
    %264 = vmatpush.msra.mxu0 0.0
    %265 = vmatpush.msra.mxu0 0.0
    %266 = vmatpush.msra.mxu0 %v56
    %267 = vmatpush.msra.mxu0 %v55
    %268 = vmatpush.msra.mxu0 %v54
    %269 = vmatpush.msra.mxu0 %v53
    %270 = vmatmul.f32.gmra.mxu0 %v252
    %v271 = vpop.f32.mrf.mxu0
    %v272 = vadd.f32 0.0, %v271
    %273 = vdwg.mxu0
    %v274 = vadd.f32 %v109, %v272
    %v275 = vxor.u32 %v274, 2147483648
    %v276 = vmul.f32 %v275, 1.442695
    %v277 = vpow.pop %v276
    %v278 = vadd.f32 %v277, 1.0
    %v279 = vrcp.pop %v278
    %v280 = vmul.f32 %v278, %v279
    %v281 = vsub.f32 1.0, %v280
    %v282 = vmul.f32 %v279, %v281
    %v283 = vadd.f32 %v279, %v282
    %vm284 = vweird.f32 %v278
    %vm285 = vweird.f32 %v279
    %vm286 = vmor %vm284, %vm285
    %v287 = vsel %vm286, %v279, %v283
    %v288 = vand.u32 2147483647, %v278
    %vm289 = vcmp.eq.f32.partialorder %v288, 8.507059e+37
    %v290 = vand.u32 %v278, 2147483648
    %v291 = vor.u32 1.1754944e-38, %v290
    %v292 = vsel %vm289, %v291, %v287
    %v293 = vmul.f32 1.0, %v292
    %v294 = vadd.f32 %v272, %v163
    %296 = vrot.lane.b32.xlu0 %v294, 64
    %v297 = vpop.permute.xlu0 %296
    %v299 = vmul.f32 %v293, %v297
    %301 = vrot.lane.b32.xlu0 %v299, 64
    %v302 = vpop.permute.xlu0 %301
    %v304 = vadd.f32 %v109, %v302
    %v305 = vtanh.pop %v304
    %v306 = vsub.f32 1.0, %v293
    %308 = vrot.lane.b32.xlu0 %v305, 96
    %v309 = vpop.permute.xlu0 %308
    %v311 = vmul.f32 %v306, %v309
    %v312 = vmul.f32 %v293, %v184
    %v313 = vadd.f32 %v311, %v312
    %315 = vrot.lane.b32.xlu0 %v313, 96
    %v316 = vpop.permute.xlu0 %315
    %v318 = vsel %vm117, %v316, %v251
    %v320 = vsel %vm190, %v318, 0
    %322 = vmatpush.msra.mxu0 0.0
    %323 = vmatpush.msra.mxu0 0.0
    %324 = vmatpush.msra.mxu0 0.0
    %325 = vmatpush.msra.mxu0 0.0
    %326 = vmatpush.msra.mxu0 0.0
    %327 = vmatpush.msra.mxu0 0.0
    %328 = vmatpush.msra.mxu0 0.0
    %329 = vmatpush.msra.mxu0 0.0
    %330 = vmatpush.msra.mxu0 %v64
    %331 = vmatpush.msra.mxu0 %v63
    %332 = vmatpush.msra.mxu0 %v62
    %333 = vmatpush.msra.mxu0 %v61
    %334 = vmatpush.msra.mxu0 %v60
    %335 = vmatpush.msra.mxu0 %v59
    %336 = vmatpush.msra.mxu0 %v58
    %337 = vmatpush.msra.mxu0 %v57
    %338 = vmatmul.f32.gmra.mxu0 %v320
    %v339 = vpop.f32.mrf.mxu0
    %v340 = vadd.f32 %v69, %v339
    %341 = vdwg.mxu0
    %v342 = vxor.u32 %v340, 2147483648
    %v343 = vmul.f32 %v342, 1.442695
    %v344 = vpow.pop %v343
    %v345 = vadd.f32 %v344, 1.0
    %v346 = vrcp.pop %v345
    %v347 = vmul.f32 %v345, %v346
    %v348 = vsub.f32 1.0, %v347
    %v349 = vmul.f32 %v346, %v348
    %v350 = vadd.f32 %v346, %v349
    %vm351 = vweird.f32 %v345
    %vm352 = vweird.f32 %v346
    %vm353 = vmor %vm351, %vm352
    %v354 = vsel %vm353, %v346, %v350
    %v355 = vand.u32 2147483647, %v345
    %vm356 = vcmp.eq.f32.partialorder %v355, 8.507059e+37
    %v357 = vand.u32 %v345, 2147483648
    %v358 = vor.u32 1.1754944e-38, %v357
    %v359 = vsel %vm356, %v358, %v354
    %v360 = vmul.f32 1.0, %v359
    %362 = vrot.lane.b32.xlu0 %v340, 32
    %v363 = vpop.permute.xlu0 %362
    %v365 = vmul.f32 %v360, %v363
    %367 = vrot.lane.b32.xlu0 %v365, 64
    %v368 = vpop.permute.xlu0 %367
    %v370 = vadd.f32 %v340, %v368
    %v371 = vtanh.pop %v370
    %v372 = vsub.f32 1.0, %v360
    %374 = vrot.lane.b32.xlu0 %v371, 96
    %v375 = vpop.permute.xlu0 %374
    %v377 = vmul.f32 %v372, %v375
    %v378 = vmul.f32 %v360, %v251
    %v379 = vadd.f32 %v377, %v378
    %v380 = vsel %vm117, %v316, 0
    %382 = vmatpush.msra.mxu0 0.0
    %383 = vmatpush.msra.mxu0 0.0
    %384 = vmatpush.msra.mxu0 0.0
    %385 = vmatpush.msra.mxu0 0.0
    %386 = vmatpush.msra.mxu0 0.0
    %387 = vmatpush.msra.mxu0 0.0
    %388 = vmatpush.msra.mxu0 0.0
    %389 = vmatpush.msra.mxu0 0.0
    %390 = vmatpush.msra.mxu0 0.0
    %391 = vmatpush.msra.mxu0 0.0
    %392 = vmatpush.msra.mxu0 0.0
    %393 = vmatpush.msra.mxu0 0.0
    %394 = vmatpush.msra.mxu0 %v56
    %395 = vmatpush.msra.mxu0 %v55
    %396 = vmatpush.msra.mxu0 %v54
    %397 = vmatpush.msra.mxu0 %v53
    %398 = vmatmul.f32.gmra.mxu0 %v380
    %v399 = vpop.f32.mrf.mxu0
    %v400 = vadd.f32 0.0, %v399
    %401 = vdwg.mxu0
    %v402 = vadd.f32 %v112, %v400
    %v403 = vxor.u32 %v402, 2147483648
    %v404 = vmul.f32 %v403, 1.442695
    %v405 = vpow.pop %v404
    %v406 = vadd.f32 %v405, 1.0
    %v407 = vrcp.pop %v406
    %v408 = vmul.f32 %v406, %v407
    %v409 = vsub.f32 1.0, %v408
    %v410 = vmul.f32 %v407, %v409
    %v411 = vadd.f32 %v407, %v410
    %vm412 = vweird.f32 %v406
    %vm413 = vweird.f32 %v407
    %vm414 = vmor %vm412, %vm413
    %v415 = vsel %vm414, %v407, %v411
    %v416 = vand.u32 2147483647, %v406
    %vm417 = vcmp.eq.f32.partialorder %v416, 8.507059e+37
    %v418 = vand.u32 %v406, 2147483648
    %v419 = vor.u32 1.1754944e-38, %v418
    %v420 = vsel %vm417, %v419, %v415
    %v421 = vmul.f32 1.0, %v420
    %v422 = vadd.f32 %v400, %v163
    %424 = vrot.lane.b32.xlu0 %v422, 64
    %v425 = vpop.permute.xlu0 %424
    %v427 = vmul.f32 %v421, %v425
    %429 = vrot.lane.b32.xlu0 %v427, 64
    %v430 = vpop.permute.xlu0 %429
    %v432 = vadd.f32 %v112, %v430
    %v433 = vtanh.pop %v432
    %v434 = vsub.f32 1.0, %v421
    %436 = vrot.lane.b32.xlu0 %v433, 96
    %v437 = vpop.permute.xlu0 %436
    %v439 = vmul.f32 %v434, %v437
    %v440 = vmul.f32 %v421, %v313
    %v441 = vadd.f32 %v439, %v440
    %443 = vrot.lane.b32.xlu0 %v441, 96
    %v444 = vpop.permute.xlu0 %443
    %v446 = vsel %vm117, %v444, %v379
    %v448 = vsel %vm190, %v446, 0
    %450 = vmatpush.msra.mxu0 0.0
    %451 = vmatpush.msra.mxu0 0.0
    %452 = vmatpush.msra.mxu0 0.0
    %453 = vmatpush.msra.mxu0 0.0
    %454 = vmatpush.msra.mxu0 0.0
    %455 = vmatpush.msra.mxu0 0.0
    %456 = vmatpush.msra.mxu0 0.0
    %457 = vmatpush.msra.mxu0 0.0
    %458 = vmatpush.msra.mxu0 %v64
    %459 = vmatpush.msra.mxu0 %v63
    %460 = vmatpush.msra.mxu0 %v62
    %461 = vmatpush.msra.mxu0 %v61
    %462 = vmatpush.msra.mxu0 %v60
    %463 = vmatpush.msra.mxu0 %v59
    %464 = vmatpush.msra.mxu0 %v58
    %465 = vmatpush.msra.mxu0 %v57
    %466 = vmatmul.f32.gmra.mxu0 %v448
    %v467 = vpop.f32.mrf.mxu0
    %v468 = vadd.f32 %v69, %v467
    %469 = vdwg.mxu0
    %v470 = vxor.u32 %v468, 2147483648
    %v471 = vmul.f32 %v470, 1.442695
    %v472 = vpow.pop %v471
    %v473 = vadd.f32 %v472, 1.0
    %v474 = vrcp.pop %v473
    %v475 = vmul.f32 %v473, %v474
    %v476 = vsub.f32 1.0, %v475
    %v477 = vmul.f32 %v474, %v476
    %v478 = vadd.f32 %v474, %v477
    %vm479 = vweird.f32 %v473
    %vm480 = vweird.f32 %v474
    %vm481 = vmor %vm479, %vm480
    %v482 = vsel %vm481, %v474, %v478
    %v483 = vand.u32 2147483647, %v473
    %vm484 = vcmp.eq.f32.partialorder %v483, 8.507059e+37
    %v485 = vand.u32 %v473, 2147483648
    %v486 = vor.u32 1.1754944e-38, %v485
    %v487 = vsel %vm484, %v486, %v482
    %v488 = vmul.f32 1.0, %v487
    %490 = vrot.lane.b32.xlu0 %v468, 32
    %v491 = vpop.permute.xlu0 %490
    %v493 = vmul.f32 %v488, %v491
    %495 = vrot.lane.b32.xlu0 %v493, 64
    %v496 = vpop.permute.xlu0 %495
    %v498 = vadd.f32 %v468, %v496
    %v499 = vtanh.pop %v498
    %v500 = vsub.f32 1.0, %v488
    %502 = vrot.lane.b32.xlu0 %v499, 96
    %v503 = vpop.permute.xlu0 %502
    %v505 = vmul.f32 %v500, %v503
    %v506 = vmul.f32 %v488, %v379
    %v507 = vadd.f32 %v505, %v506
    %v508 = vsel %vm117, %v444, 0
    %510 = vmatpush.msra.mxu0 0.0
    %511 = vmatpush.msra.mxu0 0.0
    %512 = vmatpush.msra.mxu0 0.0
    %513 = vmatpush.msra.mxu0 0.0
    %514 = vmatpush.msra.mxu0 0.0
    %515 = vmatpush.msra.mxu0 0.0
    %516 = vmatpush.msra.mxu0 0.0
    %517 = vmatpush.msra.mxu0 0.0
    %518 = vmatpush.msra.mxu0 0.0
    %519 = vmatpush.msra.mxu0 0.0
    %520 = vmatpush.msra.mxu0 0.0
    %521 = vmatpush.msra.mxu0 0.0
    %522 = vmatpush.msra.mxu0 %v56
    %523 = vmatpush.msra.mxu0 %v55
    %524 = vmatpush.msra.mxu0 %v54
    %525 = vmatpush.msra.mxu0 %v53
    %526 = vmatmul.f32.gmra.mxu0 %v508
    %v527 = vpop.f32.mrf.mxu0
    %v528 = vadd.f32 0.0, %v527
    %529 = vdwg.mxu0
    %v530 = vadd.f32 %v115, %v528
    %v531 = vxor.u32 %v530, 2147483648
    %v532 = vmul.f32 %v531, 1.442695
    %v533 = vpow.pop %v532
    %v534 = vadd.f32 %v533, 1.0
    %v535 = vrcp.pop %v534
    %v536 = vmul.f32 %v534, %v535
    %v537 = vsub.f32 1.0, %v536
    %v538 = vmul.f32 %v535, %v537
    %v539 = vadd.f32 %v535, %v538
    %vm540 = vweird.f32 %v534
    %vm541 = vweird.f32 %v535
    %vm542 = vmor %vm540, %vm541
    %v543 = vsel %vm542, %v535, %v539
    %v544 = vand.u32 2147483647, %v534
    %vm545 = vcmp.eq.f32.partialorder %v544, 8.507059e+37
    %v546 = vand.u32 %v534, 2147483648
    %v547 = vor.u32 1.1754944e-38, %v546
    %v548 = vsel %vm545, %v547, %v543
    %v549 = vmul.f32 1.0, %v548
    %v550 = vadd.f32 %v528, %v163
    %552 = vrot.lane.b32.xlu0 %v550, 64
    %v553 = vpop.permute.xlu0 %552
    %v555 = vmul.f32 %v549, %v553
    %557 = vrot.lane.b32.xlu0 %v555, 64
    %v558 = vpop.permute.xlu0 %557
    %v560 = vadd.f32 %v115, %v558
    %v561 = vtanh.pop %v560
    %v562 = vsub.f32 1.0, %v549
    %564 = vrot.lane.b32.xlu0 %v561, 96
    %v565 = vpop.permute.xlu0 %564
    %v567 = vmul.f32 %v562, %v565
    %v568 = vmul.f32 %v549, %v441
    %v569 = vadd.f32 %v567, %v568
    %571 = vrot.lane.b32.xlu0 %v569, 96
    %v572 = vpop.permute.xlu0 %571
    %v574 = vsel %vm117, %v572, %v507
    %v576 = vsel %vm190, %v574, 0
    %578 = vmatpush.msra.mxu0 0.0
    %579 = vmatpush.msra.mxu0 0.0
    %580 = vmatpush.msra.mxu0 0.0
    %581 = vmatpush.msra.mxu0 0.0
    %582 = vmatpush.msra.mxu0 0.0
    %583 = vmatpush.msra.mxu0 0.0
    %584 = vmatpush.msra.mxu0 0.0
    %585 = vmatpush.msra.mxu0 0.0
    %586 = vmatpush.msra.mxu0 %v64
    %587 = vmatpush.msra.mxu0 %v63
    %588 = vmatpush.msra.mxu0 %v62
    %589 = vmatpush.msra.mxu0 %v61
    %590 = vmatpush.msra.mxu0 %v60
    %591 = vmatpush.msra.mxu0 %v59
    %592 = vmatpush.msra.mxu0 %v58
    %593 = vmatpush.msra.mxu0 %v57
    %594 = vmatmul.f32.gmra.mxu0 %v576
    %v595 = vpop.f32.mrf.mxu0
    %v596 = vadd.f32 %v69, %v595
    %597 = vdwg.mxu0
    %v598 = vxor.u32 %v596, 2147483648
    %v599 = vmul.f32 %v598, 1.442695
    %v600 = vpow.pop %v599
    %v601 = vadd.f32 %v600, 1.0
    %v602 = vrcp.pop %v601
    %v603 = vmul.f32 %v601, %v602
    %v604 = vsub.f32 1.0, %v603
    %v605 = vmul.f32 %v602, %v604
    %v606 = vadd.f32 %v602, %v605
    %vm607 = vweird.f32 %v601
    %vm608 = vweird.f32 %v602
    %vm609 = vmor %vm607, %vm608
    %v610 = vsel %vm609, %v602, %v606
    %v611 = vand.u32 2147483647, %v601
    %vm612 = vcmp.eq.f32.partialorder %v611, 8.507059e+37
    %v613 = vand.u32 %v601, 2147483648
    %v614 = vor.u32 1.1754944e-38, %v613
    %v615 = vsel %vm612, %v614, %v610
    %v616 = vmul.f32 1.0, %v615
    %618 = vrot.lane.b32.xlu0 %v596, 32
    %v619 = vpop.permute.xlu0 %618
    %v621 = vmul.f32 %v616, %v619
    %623 = vrot.lane.b32.xlu0 %v621, 64
    %v624 = vpop.permute.xlu0 %623
    %v626 = vadd.f32 %v596, %v624
    %v627 = vtanh.pop %v626
    %v628 = vsub.f32 1.0, %v616
    %630 = vrot.lane.b32.xlu0 %v627, 96
    %v631 = vpop.permute.xlu0 %630
    %v633 = vmul.f32 %v628, %v631
    %v634 = vmul.f32 %v616, %v507
    %v635 = vadd.f32 %v633, %v634
    %v636 = vld [vmem:[#allocation5] sm:$0xff]
    %v637 = vld [vmem:[#allocation5 + $0x8] sm:$0xff]
    %v638 = vld [vmem:[#allocation5 + $0x10] sm:$0xff]
    %v639 = vld [vmem:[#allocation5 + $0x18] sm:$0xff]
    %644 = vrot.lane.b32.xlu0 %v251, 96
    %v645 = vpop.permute.xlu0 %644
    %646 = vrot.lane.b32.xlu0 %v379, 96
    %v647 = vpop.permute.xlu0 %646
    %648 = vrot.lane.b32.xlu0 %v507, 96
    %v649 = vpop.permute.xlu0 %648
    %650 = vrot.lane.b32.xlu0 %v635, 96
    %v651 = vpop.permute.xlu0 %650
    %v652 = vsel %vm117, %v645, 0
    %v654 = vsel %vm117, %v647, 0
    %v656 = vsel %vm117, %v649, 0
    %v658 = vsel %vm117, %v651, 0
    %660 = vmatpush.msra.mxu0 0.0
    %661 = vmatpush.msra.mxu0 0.0
    %662 = vmatpush.msra.mxu0 0.0
    %663 = vmatpush.msra.mxu0 0.0
    %664 = vmatpush.msra.mxu0 0.0
    %665 = vmatpush.msra.mxu0 0.0
    %666 = vmatpush.msra.mxu0 0.0
    %667 = vmatpush.msra.mxu0 0.0
    %668 = vmatpush.msra.mxu0 0.0
    %669 = vmatpush.msra.mxu0 0.0
    %670 = vmatpush.msra.mxu0 0.0
    %671 = vmatpush.msra.mxu0 0.0
    %672 = vmatpush.msra.mxu0 %v639
    %673 = vmatpush.msra.mxu0 %v638
    %674 = vmatpush.msra.mxu0 %v637
    %675 = vmatpush.msra.mxu0 %v636
    %676 = vmatmul.f32.gmra.mxu0 %v652
    %v677 = vpop.f32.mrf.mxu0
    %v678 = vadd.f32 0.0, %v677
    %679 = vmatmul.f32.gmra.mxu0 %v654
    %v680 = vpop.f32.mrf.mxu0
    %v681 = vadd.f32 0.0, %v680
    %682 = vmatmul.f32.gmra.mxu0 %v656
    %v683 = vpop.f32.mrf.mxu0
    %v684 = vadd.f32 0.0, %v683
    %685 = vmatmul.f32.gmra.mxu0 %v658
    %v686 = vpop.f32.mrf.mxu0
    %v687 = vadd.f32 0.0, %v686
    %688 = vdwg.mxu0
    %v689 = vld [vmem:[#allocation5 + $0x20] sm:$0xff]
    %v690 = vld [vmem:[#allocation5 + $0x28] sm:$0xff]
    %v691 = vld [vmem:[#allocation5 + $0x30] sm:$0xff]
    %v692 = vld [vmem:[#allocation5 + $0x38] sm:$0xff]
    %v693 = vld [vmem:[#allocation5 + $0x40] sm:$0xff]
    %v694 = vld [vmem:[#allocation5 + $0x48] sm:$0xff]
    %v695 = vld [vmem:[#allocation5 + $0x50] sm:$0xff]
    %v696 = vld [vmem:[#allocation5 + $0x58] sm:$0xff]
    %698 = vset.pattern.permute.xlu0 32
    %699 = vperm.xlu0 %698, %v689
    %v700 = vpop.permute.xlu0 %699
    %703 = vset.pattern.permute.xlu0 32
    %704 = vperm.xlu0 %703, %v690
    %v705 = vpop.permute.xlu0 %704
    %708 = vset.pattern.permute.xlu0 32
    %709 = vperm.xlu0 %708, %v691
    %v710 = vpop.permute.xlu0 %709
    %713 = vset.pattern.permute.xlu0 32
    %714 = vperm.xlu0 %713, %v692
    %v715 = vpop.permute.xlu0 %714
    %718 = vset.pattern.permute.xlu0 32
    %719 = vperm.xlu0 %718, %v693
    %v720 = vpop.permute.xlu0 %719
    %723 = vset.pattern.permute.xlu0 32
    %724 = vperm.xlu0 %723, %v694
    %v725 = vpop.permute.xlu0 %724
    %728 = vset.pattern.permute.xlu0 32
    %729 = vperm.xlu0 %728, %v695
    %v730 = vpop.permute.xlu0 %729
    %733 = vset.pattern.permute.xlu0 32
    %734 = vperm.xlu0 %733, %v696
    %v735 = vpop.permute.xlu0 %734
    %v737 = vsel %vm117, %v689, 0
    %v739 = vsel %vm117, %v690, 0
    %v741 = vsel %vm117, %v691, 0
    %v743 = vsel %vm117, %v692, 0
    %v745 = vsel %vm117, %v693, 0
    %v747 = vsel %vm117, %v694, 0
    %v749 = vsel %vm117, %v695, 0
    %v751 = vsel %vm117, %v696, 0
    %753 = vmatpush.msra.mxu0 0.0
    %754 = vmatpush.msra.mxu0 0.0
    %755 = vmatpush.msra.mxu0 0.0
    %756 = vmatpush.msra.mxu0 0.0
    %757 = vmatpush.msra.mxu0 0.0
    %758 = vmatpush.msra.mxu0 0.0
    %759 = vmatpush.msra.mxu0 0.0
    %760 = vmatpush.msra.mxu0 0.0
    %761 = vmatpush.msra.mxu0 0.0
    %762 = vmatpush.msra.mxu0 0.0
    %763 = vmatpush.msra.mxu0 0.0
    %764 = vmatpush.msra.mxu0 0.0
    %765 = vmatpush.msra.mxu0 %v687
    %766 = vmatpush.msra.mxu0 %v684
    %767 = vmatpush.msra.mxu0 %v681
    %768 = vmatpush.msra.mxu0 %v678
    %769 = vmatmul.f32.gmra.mxu0 %v737
    %v770 = vpop.f32.mrf.mxu0
    %v771 = vadd.f32 %v700, %v770
    %772 = vmatmul.f32.gmra.mxu0 %v739
    %v773 = vpop.f32.mrf.mxu0
    %v774 = vadd.f32 %v705, %v773
    %775 = vmatmul.f32.gmra.mxu0 %v741
    %v776 = vpop.f32.mrf.mxu0
    %v777 = vadd.f32 %v710, %v776
    %778 = vmatmul.f32.gmra.mxu0 %v743
    %v779 = vpop.f32.mrf.mxu0
    %v780 = vadd.f32 %v715, %v779
    %781 = vmatmul.f32.gmra.mxu0 %v745
    %v782 = vpop.f32.mrf.mxu0
    %v783 = vadd.f32 %v720, %v782
    %784 = vmatmul.f32.gmra.mxu0 %v747
    %v785 = vpop.f32.mrf.mxu0
    %v786 = vadd.f32 %v725, %v785
    %787 = vmatmul.f32.gmra.mxu0 %v749
    %v788 = vpop.f32.mrf.mxu0
    %v789 = vadd.f32 %v730, %v788
    %790 = vmatmul.f32.gmra.mxu0 %v751
    %v791 = vpop.f32.mrf.mxu0
    %v792 = vadd.f32 %v735, %v791
    %793 = vdwg.mxu0
    %v794 = vmax.f32 %v771, 0.0
    %v795 = vmax.f32 %v774, 0.0
    %v796 = vmax.f32 %v777, 0.0
    %v797 = vmax.f32 %v780, 0.0
    %v798 = vmax.f32 %v783, 0.0
    %v799 = vmax.f32 %v786, 0.0
    %v800 = vmax.f32 %v789, 0.0
    %v801 = vmax.f32 %v792, 0.0
    %v802 = vld [vmem:[#allocation5 + $0x60] sm:$0xf]
    %804 = vrot.lane.b32.xlu0 %v802, 64
    %v805 = vpop.permute.xlu0 %804
    %s806 = vtos %v805
    %v807 = vstv %s806
    %v809 = vsel %vm190, %v802, 0
    %811 = vmatpush.msra.mxu0 0.0
    %812 = vmatpush.msra.mxu0 0.0
    %813 = vmatpush.msra.mxu0 0.0
    %814 = vmatpush.msra.mxu0 0.0
    %815 = vmatpush.msra.mxu0 0.0
    %816 = vmatpush.msra.mxu0 0.0
    %817 = vmatpush.msra.mxu0 0.0
    %818 = vmatpush.msra.mxu0 0.0
    %819 = vmatpush.msra.mxu0 %v801
    %820 = vmatpush.msra.mxu0 %v800
    %821 = vmatpush.msra.mxu0 %v799
    %822 = vmatpush.msra.mxu0 %v798
    %823 = vmatpush.msra.mxu0 %v797
    %824 = vmatpush.msra.mxu0 %v796
    %825 = vmatpush.msra.mxu0 %v795
    %826 = vmatpush.msra.mxu0 %v794
    %827 = vmatmul.f32.gmra.mxu0 %v809
    %v828 = vpop.f32.mrf.mxu0
    %v829 = vadd.f32 %v807, %v828
    %830 = vdwg.mxu0
    %vm831 = vcmask 76800
    %832 = vst.msk [vmem:[#allocation7] sm:$0xf] %vm831, %v829
    %v833 = vsel %vm831, %v829, -inf
    %834 = vmax.xlane.f32.xlu0 %v833
    %v835 = vpop.xlane.xlu0 %834
    %v836 = vsub.f32 %v829, %v835
    %v837 = vmul.f32 %v836, 1.442695
    %v838 = vpow.pop %v837
    %v839 = vsel %vm831, %v838, 0.0
    %840 = vadd.xlane.f32.xlu0 %v839
    %v841 = vpop.xlane.xlu0 %840
    %v842 = vrcp.pop %v841
    %v843 = vmul.f32 %v841, %v842
    %v844 = vsub.f32 1.0, %v843
    %v845 = vmul.f32 %v842, %v844
    %v846 = vadd.f32 %v842, %v845
    %vm847 = vweird.f32 %v841
    %vm848 = vweird.f32 %v842
    %vm849 = vmor %vm847, %vm848
    %v850 = vsel %vm849, %v842, %v846
    %v851 = vand.u32 2147483647, %v841
    %vm852 = vcmp.eq.f32.partialorder %v851, 8.507059e+37
    %v853 = vand.u32 %v841, 2147483648
    %v854 = vor.u32 1.1754944e-38, %v853
    %v855 = vsel %vm852, %v854, %v850
    %v856 = vmul.f32 %v838, %v855
    %857 = vst.msk [vmem:[#allocation8] sm:$0xf] %vm831, %v856
    %v858 = vlaneseq
    %v859 = vand.u32 %v858, 127
    %vm860 = vcmp.eq.f32.partialorder %v829, %v835
    %v861 = vsel %vm860, %v859, 10
    %v862 = vsel %vm831, %v861, 2147483647
    %v863 = vand.u32 %v862, 65535
    %v864 = vshra.s32 %v862, 16
    %v865 = vcvt.s32.f32 %v863
    %v866 = vcvt.s32.f32 %v864
    %867 = vmin.xlane.f32.xlu0 %v866
    %v868 = vpop.xlane.xlu0 %867
    %vm869 = vcmp.eq.f32.partialorder %v866, %v868
    %v870 = vsel %vm869, %v865, inf
    %871 = vmin.xlane.f32.xlu0 %v870
    %v872 = vpop.xlane.xlu0 %871
    %v873 = vcvt.f32.s32 %v872
    %v874 = vcvt.f32.s32 %v868
    %v875 = vshll.u32 %v874, 16
    %v876 = vadd.s32 %v875, %v873
    %vm877 = vcmask 3072
    %878 = vst.msk [vmem:[%s5] sm:$0xf] %vm877, %v876
    // Predicated region
    $region22: #{tpu_custom_call.1} parent=1 // pred_check
      _
    $region23: #{tpu_custom_call.1} parent=1 // pred_check_branch
      %880 = sbr.rel (0) target = $region25
    $region24: #{tpu_custom_call.1} parent=1 // pred_region
      %882 = vsyncadd [#allocation4], 0
      %s884 = sshll.u32 [#allocation7], 4
      %s885 = int_to_ptr.vmem [resolvable:$true] %s884
      %s886 = sshll.u32 %s3, 4
      %s887 = int_to_ptr.hbm [resolvable:$true] %s886
      %889 = dma.vmem_to_hbm [thread:$0]  %s885, 64, %s887, [#allocation4]
    $region25: #{tpu_custom_call.1} parent=1 // pred_fallthru
      _
    // Predicated region
    $region26: #{tpu_custom_call.1} parent=1 // pred_check
      _
    $region27: #{tpu_custom_call.1} parent=1 // pred_check_branch
      %891 = sbr.rel (0) target = $region29
    $region28: #{tpu_custom_call.1} parent=1 // pred_region
      %893 = vsyncadd [#allocation9], 0
      %s895 = sshll.u32 [#allocation8], 4
      %s896 = int_to_ptr.vmem [resolvable:$true] %s895
      %s897 = sshll.u32 %s4, 4
      %s898 = int_to_ptr.hbm [resolvable:$true] %s897
      %900 = dma.vmem_to_hbm [thread:$0]  %s896, 64, %s898, [#allocation9]
    $region29: #{tpu_custom_call.1} parent=1 // pred_fallthru
      _
    // Predicated region
    $region30: #{tpu_custom_call.1} parent=1 // pred_check
      _
    $region31: #{tpu_custom_call.1} parent=1 // pred_check_branch
      %902 = sbr.rel (0) target = $region33
    $region32: #{tpu_custom_call.1} parent=1 // pred_region
      _
    $region33: #{tpu_custom_call.1} parent=1 // pred_fallthru
      _
    // Predicated region
    $region34: #{tpu_custom_call.1} parent=1 // pred_check
      _
    $region35: #{tpu_custom_call.1} parent=1 // pred_check_branch
      %904 = sbr.rel (0) target = $region37
    $region36: #{tpu_custom_call.1} parent=1 // pred_region
      %906 = dma.done [#allocation4], 64
    $region37: #{tpu_custom_call.1} parent=1 // pred_fallthru
      _
    // Predicated region
    $region38: #{tpu_custom_call.1} parent=1 // pred_check
      _
    $region39: #{tpu_custom_call.1} parent=1 // pred_check_branch
      %908 = sbr.rel (0) target = $region41
    $region40: #{tpu_custom_call.1} parent=1 // pred_region
      %910 = dma.done [#allocation9], 64
    $region41: #{tpu_custom_call.1} parent=1 // pred_fallthru
      _
    // Predicated region
    $region42: #{tpu_custom_call.1} parent=1 // pred_check
      _
    $region43: #{tpu_custom_call.1} parent=1 // pred_check_branch
      %912 = sbr.rel (0) target = $region45
    $region44: #{tpu_custom_call.1} parent=1 // pred_region
      _
    $region45: #{tpu_custom_call.1} parent=1 // pred_fallthru
      _
    %913 = vsyncpa [#allocation3], 1
    %914 = vsyncpa [#allocation6], 1
    %915 = vsyncpa [#allocation4], 1
    %916 = vsyncpa [#allocation9], 1

</llo_original>
